<compile_context>
chip_gen: v6e
topology: v6e:2x2x1
jax: 0.10.0
libtpu: 0.0.40
codegen_flags: <defaults>
</compile_context>

<pallas_src>
import jax
import jax.numpy as jnp
from jax.experimental import pallas as pl
from jax.experimental.pallas import tpu as pltpu


NEG_INF = jnp.float32(-1e30)   # pad-lane bias: exp underflows to 0, softmax unchanged


def decoder_seq_kernel(tok_ref,       # SMEM (T,) int32   token ids (scalar prefetch)
                       emb_ref,       # VMEM (V, E)       embedding table
                       h0_ref,        # VMEM (1, H)       initial hidden state
                       wg_ref,        # VMEM (E+H, 4H)    packed GRU gate weights
                       bg_ref,        # VMEM (1, 4H)      packed GRU gate biases
                       wout_ref,      # VMEM (H, Vp)      output projection (vocab-padded)
                       bout_ref,      # VMEM (1, Vp)      output bias (-1e30 on pad lanes)
                       logp_ref,      # out  (1, 1, Vp)   per-step log-probs
                       hT_ref,        # out  (1, H)       final hidden state
                       h_scr):        # VMEM scratch (1, H) carried hidden state
    t = pl.program_id(0)
    H = h_scr.shape[1]

    @pl.when(t == 0)
    def _():
        h_scr[...] = h0_ref[...]

    token = tok_ref[t]

    # In-kernel embedding lookup + ReLU (no separate XLA gather / HBM round trip).
    x = jnp.maximum(emb_ref[pl.ds(token, 1), :], 0.0)              # (1, E)
    h = h_scr[...]                                                  # (1, H)

    # Fused GRU gates: one (1, E+H) @ (E+H, 4H) lane-dense MXU matmul.
    #   cols [0:H)    r gate:   [W_ir ; W_hr],  bias b_ir + b_hr
    #   cols [H:2H)   z gate:   [W_iz ; W_hz],  bias b_iz + b_hz
    #   cols [2H:3H)  n input:  [W_in ; 0   ],  bias b_in
    #   cols [3H:4H)  n hidden: [0    ; W_hn],  bias b_hn   (kept separate: r-scaled)
    xh = jnp.concatenate([x, h], axis=1)                            # (1, E+H)
    g = jnp.dot(xh, wg_ref[...], preferred_element_type=jnp.float32) + bg_ref[...]

    r = jax.nn.sigmoid(g[:, 0:H])
    z = jax.nn.sigmoid(g[:, H:2 * H])
    n = jnp.tanh(g[:, 2 * H:3 * H] + r * g[:, 3 * H:4 * H])
    h_new = (1.0 - z) * n + z * h                                   # (1, H)

    h_scr[...] = h_new
    hT_ref[...] = h_new        # resident output block; written back to HBM once

    # Output projection + log-softmax over a lane-dense (1, Vp) row.
    logits = jnp.dot(h_new, wout_ref[...],
                     preferred_element_type=jnp.float32) + bout_ref[...]   # (1, Vp)
    m = jnp.max(logits, axis=1, keepdims=True)
    shifted = logits - m
    lse = jnp.log(jnp.sum(jnp.exp(shifted), axis=1, keepdims=True))
    logp_ref[0] = shifted - lse


def decoder_rnn_decode(tokens, hidden, packed):
    """Run T decoder steps in ONE pallas_call (weights loaded into VMEM once).

    tokens: (T,) int32; hidden: (1, 1, H).
    Returns (logp (T, V), hidden (1, 1, H)).
    """
    emb = packed["embedding"]
    wg, bg = packed["w_gate"], packed["b_gate"]
    wo, bo = packed["w_out"], packed["b_out"]
    V = packed["output_size"]

    Vtab, E = emb.shape
    H = wo.shape[0]
    Vp = wo.shape[1]
    T = tokens.shape[0]

    h0 = hidden.reshape(1, H).astype(jnp.float32)

    grid_spec = pltpu.PrefetchScalarGridSpec(
        num_scalar_prefetch=1,
        grid=(T,),
        in_specs=[
            pl.BlockSpec((Vtab, E), lambda t, tok: (0, 0)),        # embedding (resident)
            pl.BlockSpec((1, H), lambda t, tok: (0, 0)),           # h0
            pl.BlockSpec((E + H, 4 * H), lambda t, tok: (0, 0)),   # packed gate weights
            pl.BlockSpec((1, 4 * H), lambda t, tok: (0, 0)),       # packed gate biases
            pl.BlockSpec((H, Vp), lambda t, tok: (0, 0)),          # output projection
            pl.BlockSpec((1, Vp), lambda t, tok: (0, 0)),          # output bias
        ],
        out_specs=(
            pl.BlockSpec((1, 1, Vp), lambda t, tok: (t, 0, 0)),    # per-step log-probs
            pl.BlockSpec((1, H), lambda t, tok: (0, 0)),           # final hidden
        ),
        scratch_shapes=[pltpu.VMEM((1, H), jnp.float32)],
    )

    logp_pad, h_last = pl.pallas_call(
        decoder_seq_kernel,
        out_shape=(jax.ShapeDtypeStruct((T, 1, Vp), jnp.float32),
                   jax.ShapeDtypeStruct((1, H), jnp.float32)),
        grid_spec=grid_spec,
        compiler_params=pltpu.CompilerParams(
            dimension_semantics=("arbitrary",)),   # sequential hidden-state carry
    )(tokens.astype(jnp.int32), emb, h0, wg, bg, wo, bo)

    logp = logp_pad.reshape(T, Vp)[:, :V]
    return logp, h_last.reshape(1, 1, H)


def decoder_rnn_forward(token, hidden, packed):
    """Single step matching DecoderRNN.forward: returns ((1, V), (1, 1, H))."""
    tokens = jnp.asarray(token, jnp.int32).reshape(1)
    logp, h_new = decoder_rnn_decode(tokens, hidden, packed)
    return logp.reshape(1, -1), h_new


# ----------------------------- parameters -----------------------------------

def init_params(key, embedding_size, hidden_size, output_size):
    """PyTorch-equivalent parameters (weights stored transposed: (in, out))."""
    E, H, V = embedding_size, hidden_size, output_size
    ks = jax.random.split(key, 15)
    s = 1.0 / jnp.sqrt(H)
    u = lambda k, shape: jax.random.uniform(k, shape, jnp.float32, -s, s)
    return {
        "embedding": jax.random.normal(ks[0], (V, E), jnp.float32),
        "w_ir": u(ks[1], (E, H)), "w_iz": u(ks[2], (E, H)), "w_in": u(ks[3], (E, H)),
        "w_hr": u(ks[4], (H, H)), "w_hz": u(ks[5], (H, H)), "w_hn": u(ks[6], (H, H)),
        "b_ir": u(ks[7], (1, H)), "b_iz": u(ks[8], (1, H)), "b_in": u(ks[9], (1, H)),
        "b_hr": u(ks[10], (1, H)), "b_hz": u(ks[11], (1, H)), "b_hn": u(ks[12], (1, H)),
        "w_out": u(ks[13], (H, V)),
        "b_out": u(ks[14], (1, V)),
    }


def pack_params(p):
    """One-time packing into the kernel's fused layout (init time, not per call)."""
    E, H = p["w_ir"].shape
    V = p["w_out"].shape[1]
    Vp = max(128, ((V + 127) // 128) * 128)

    zEH = jnp.zeros((E, H), jnp.float32)
    zHH = jnp.zeros((H, H), jnp.float32)
    # (E+H, 4H): columns [ r | z | n_input | n_hidden ]
    w_gate = jnp.concatenate([
        jnp.concatenate([p["w_ir"], p["w_hr"]], axis=0),
        jnp.concatenate([p["w_iz"], p["w_hz"]], axis=0),
        jnp.concatenate([p["w_in"], zHH], axis=0),
        jnp.concatenate([zEH, p["w_hn"]], axis=0),
    ], axis=1)
    b_gate = jnp.concatenate([
        p["b_ir"] + p["b_hr"],       # fused r bias
        p["b_iz"] + p["b_hz"],       # fused z bias
        p["b_in"],
        p["b_hn"],                   # kept separate (inside r-scaled term)
    ], axis=1)

    # Lane-dense output projection: pad V -> Vp; pad bias = -1e30 so exp -> 0 and
    # the log-softmax normalization over real columns is unchanged.
    w_out = jnp.zeros((H, Vp), jnp.float32).at[:, :V].set(p["w_out"])
    b_out = jnp.full((1, Vp), NEG_INF, jnp.float32).at[:, :V].set(p["b_out"])

    return {
        "embedding": p["embedding"].astype(jnp.float32),
        "w_gate": w_gate, "b_gate": b_gate,
        "w_out": w_out, "b_out": b_out,
        "output_size": V,
    }


# ----------------------------- pure-JAX reference ----------------------------

def reference_forward(token, hidden, p):
    x = jnp.maximum(p["embedding"][token].reshape(1, -1), 0.0)
    h = hidden.reshape(1, -1)
    r = jax.nn.sigmoid(x @ p["w_ir"] + h @ p["w_hr"] + p["b_ir"] + p["b_hr"])
    z = jax.nn.sigmoid(x @ p["w_iz"] + h @ p["w_hz"] + p["b_iz"] + p["b_hz"])
    n = jnp.tanh(x @ p["w_in"] + p["b_in"] + r * (h @ p["w_hn"] + p["b_hn"]))
    h_new = (1.0 - z) * n + z * h
    logits = h_new @ p["w_out"] + p["b_out"]
    return jax.nn.log_softmax(logits, axis=1), h_new.reshape(1, 1, -1)


def reference_decode(tokens, hidden, p):
    outs, h = [], hidden
    for i in range(tokens.shape[0]):
        logp, h = reference_forward(tokens[i], h, p)
        outs.append(logp)
    return jnp.concatenate(outs, axis=0), h


if __name__ == "__main__":
    embedding_size = 32
    hidden_size = 32
    output_size = 64

    key = jax.random.PRNGKey(0)
    raw = init_params(key, embedding_size, hidden_size, output_size)
    packed = pack_params(raw)

    hidden0 = jnp.zeros((1, 1, hidden_size), jnp.float32)   # initHidden()

    # --- single step (module-faithful DecoderRNN.forward) ---
    token = jnp.int32(3)
    logp, h_new = decoder_rnn_forward(token, hidden0, packed)
    logp = jax.block_until_ready(logp)
    h_new = jax.block_until_ready(h_new)
    ref_logp, ref_h = reference_forward(token, hidden0, raw)
    assert logp.shape == (1, output_size) and h_new.shape == (1, 1, hidden_size)
    assert jnp.allclose(logp, ref_logp, atol=1e-4, rtol=1e-4)
    assert jnp.allclose(h_new, ref_h, atol=1e-4, rtol=1e-4)

    # --- fused multi-step decode: whole sequence in one pallas_call ---
    tokens = jnp.array([3, 17, 42, 7, 0, 63, 11, 5], dtype=jnp.int32)
    logp_seq, h_last = decoder_rnn_decode(tokens, hidden0, packed)
    logp_seq = jax.block_until_ready(logp_seq)
    h_last = jax.block_until_ready(h_last)
    ref_seq, ref_h_last = reference_decode(tokens, hidden0, raw)
    assert logp_seq.shape == (tokens.shape[0], output_size)
    assert jnp.allclose(logp_seq, ref_seq, atol=1e-4, rtol=1e-4)
    assert jnp.allclose(h_last, ref_h_last, atol=1e-4, rtol=1e-4)

    print("KERNEL_OK")
</pallas_src>

<mosaic_0001>
module attributes {stable_mosaic.version = 11 : i64} {
  func.func @decoder_seq_kernel(%arg0: i32, %arg1: memref<1xi32, #tpu.memory_space<smem>>, %arg2: memref<64x32xf32, #tpu.memory_space<vmem>>, %arg3: memref<1x32xf32, #tpu.memory_space<vmem>>, %arg4: memref<64x128xf32, #tpu.memory_space<vmem>>, %arg5: memref<1x128xf32, #tpu.memory_space<vmem>>, %arg6: memref<32x128xf32, #tpu.memory_space<vmem>>, %arg7: memref<1x128xf32, #tpu.memory_space<vmem>>, %arg8: memref<1x1x128xf32, #tpu.memory_space<vmem>>, %arg9: memref<1x32xf32, #tpu.memory_space<vmem>>, %arg10: memref<1x32xf32, #tpu.memory_space<vmem>>) attributes {dimension_semantics = [#tpu.dimension_semantics<arbitrary>], iteration_bounds = array<i64: 1>, scalar_prefetch = 1 : i64, scratch_operands = 1 : i64, tpu.core_type = #tpu.core_type<tc>, window_params = [{pipeline_mode = #tpu.pipeline_mode<synchronous>, transform_indices = @transform_0, window_bounds = array<i64: 64, 32>}, {pipeline_mode = #tpu.pipeline_mode<synchronous>, transform_indices = @transform_1, window_bounds = array<i64: 1, 32>}, {pipeline_mode = #tpu.pipeline_mode<synchronous>, transform_indices = @transform_2, window_bounds = array<i64: 64, 128>}, {pipeline_mode = #tpu.pipeline_mode<synchronous>, transform_indices = @transform_3, window_bounds = array<i64: 1, 128>}, {pipeline_mode = #tpu.pipeline_mode<synchronous>, transform_indices = @transform_4, window_bounds = array<i64: 32, 128>}, {pipeline_mode = #tpu.pipeline_mode<synchronous>, transform_indices = @transform_5, window_bounds = array<i64: 1, 128>}, {transform_indices = @transform_6, window_bounds = array<i64: 1, 1, 128>}, {pipeline_mode = #tpu.pipeline_mode<synchronous>, transform_indices = @transform_7, window_bounds = array<i64: 1, 32>}]} {
    %c0_i32 = arith.constant 0 : i32
    %0 = arith.cmpi eq, %arg0, %c0_i32 : i32
    %1 = arith.extui %0 : i1 to i32
    %c0_i32_0 = arith.constant 0 : i32
    %2 = arith.cmpi ne, %1, %c0_i32_0 : i32
    scf.if %2 {
      %c0_25 = arith.constant 0 : index
      %c0_26 = arith.constant 0 : index
      %56 = vector.load %arg3[%c0_25, %c0_26] : memref<1x32xf32, #tpu.memory_space<vmem>>, vector<1x32xf32>
      %c0_27 = arith.constant 0 : index
      %c0_28 = arith.constant 0 : index
      %57 = vector.load %arg10[%c0_27, %c0_28] : memref<1x32xf32, #tpu.memory_space<vmem>>, vector<1x32xf32>
      tpu.vector_store %arg10[%c0_27, %c0_28], %56 {strides = array<i32>} : memref<1x32xf32, #tpu.memory_space<vmem>>, vector<1x32xf32>,
    } else {
    }
    %3 = arith.index_cast %arg0 : i32 to index
    %4 = memref.load %arg1[%3] : memref<1xi32, #tpu.memory_space<smem>>
    %5 = arith.index_cast %4 : i32 to index
    %c0 = arith.constant 0 : index
    %6 = vector.load %arg2[%5, %c0] : memref<64x32xf32, #tpu.memory_space<vmem>>, vector<1x32xf32>
    %cst = arith.constant 0.000000e+00 : f32
    %7 = vector.broadcast %cst : f32 to vector<1x32xf32>
    %8 = arith.maximumf %6, %7 : vector<1x32xf32>
    %c0_1 = arith.constant 0 : index
    %c0_2 = arith.constant 0 : index
    %9 = vector.load %arg10[%c0_1, %c0_2] : memref<1x32xf32, #tpu.memory_space<vmem>>, vector<1x32xf32>
    %10 = tpu.concatenate %8, %9 in 1 : vector<1x32xf32>, vector<1x32xf32> -> vector<1x64xf32>
    %c0_3 = arith.constant 0 : index
    %c0_4 = arith.constant 0 : index
    %11 = vector.load %arg4[%c0_3, %c0_4] : memref<64x128xf32, #tpu.memory_space<vmem>>, vector<64x128xf32>
    %cst_5 = arith.constant dense<0.000000e+00> : vector<1x128xf32>
    %12 = tpu.matmul %10, %11, %cst_5 {dimension_numbers = #tpu.dot_dimension_numbers<[1], [0], [0], [1], [0, 0, 1, 1], [], []>} : vector<1x64xf32>, vector<64x128xf32>, vector<1x128xf32> -> vector<1x128xf32>
    %c0_6 = arith.constant 0 : index
    %c0_7 = arith.constant 0 : index
    %13 = vector.load %arg5[%c0_6, %c0_7] : memref<1x128xf32, #tpu.memory_space<vmem>>, vector<1x128xf32>
    %14 = arith.addf %12, %13 : vector<1x128xf32>
    %15 = vector.extract_strided_slice %14 {offsets = [0, 0], sizes = [1, 32], strides = [1, 1]} : vector<1x128xf32> to vector<1x32xf32>
    %16 = arith.negf %15 : vector<1x32xf32>
    %17 = math.exp %16 : vector<1x32xf32>
    %cst_8 = arith.constant 1.000000e+00 : f32
    %18 = vector.broadcast %cst_8 : f32 to vector<1x32xf32>
    %19 = arith.addf %18, %17 : vector<1x32xf32>
    %20 = arith.divf %18, %19 : vector<1x32xf32>
    %21 = vector.extract_strided_slice %14 {offsets = [0, 32], sizes = [1, 32], strides = [1, 1]} : vector<1x128xf32> to vector<1x32xf32>
    %22 = arith.negf %21 : vector<1x32xf32>
    %23 = math.exp %22 : vector<1x32xf32>
    %cst_9 = arith.constant 1.000000e+00 : f32
    %24 = vector.broadcast %cst_9 : f32 to vector<1x32xf32>
    %25 = arith.addf %24, %23 : vector<1x32xf32>
    %26 = arith.divf %24, %25 : vector<1x32xf32>
    %27 = vector.extract_strided_slice %14 {offsets = [0, 64], sizes = [1, 32], strides = [1, 1]} : vector<1x128xf32> to vector<1x32xf32>
    %28 = vector.extract_strided_slice %14 {offsets = [0, 96], sizes = [1, 32], strides = [1, 1]} : vector<1x128xf32> to vector<1x32xf32>
    %29 = arith.mulf %20, %28 : vector<1x32xf32>
    %30 = arith.addf %27, %29 : vector<1x32xf32>
    %31 = math.tanh %30 : vector<1x32xf32>
    %cst_10 = arith.constant 1.000000e+00 : f32
    %32 = vector.broadcast %cst_10 : f32 to vector<1x32xf32>
    %33 = arith.subf %32, %26 : vector<1x32xf32>
    %34 = arith.mulf %33, %31 : vector<1x32xf32>
    %35 = arith.mulf %26, %9 : vector<1x32xf32>
    %36 = arith.addf %34, %35 : vector<1x32xf32>
    %c0_11 = arith.constant 0 : index
    %c0_12 = arith.constant 0 : index
    %37 = vector.load %arg10[%c0_11, %c0_12] : memref<1x32xf32, #tpu.memory_space<vmem>>, vector<1x32xf32>
    tpu.vector_store %arg10[%c0_11, %c0_12], %36 {strides = array<i32>} : memref<1x32xf32, #tpu.memory_space<vmem>>, vector<1x32xf32>,
    %c0_13 = arith.constant 0 : index
    %c0_14 = arith.constant 0 : index
    %38 = vector.load %arg9[%c0_13, %c0_14] : memref<1x32xf32, #tpu.memory_space<vmem>>, vector<1x32xf32>
    tpu.vector_store %arg9[%c0_13, %c0_14], %36 {strides = array<i32>} : memref<1x32xf32, #tpu.memory_space<vmem>>, vector<1x32xf32>,
    %c0_15 = arith.constant 0 : index
    %c0_16 = arith.constant 0 : index
    %39 = vector.load %arg6[%c0_15, %c0_16] : memref<32x128xf32, #tpu.memory_space<vmem>>, vector<32x128xf32>
    %cst_17 = arith.constant dense<0.000000e+00> : vector<1x128xf32>
    %40 = tpu.matmul %36, %39, %cst_17 {dimension_numbers = #tpu.dot_dimension_numbers<[1], [0], [0], [1], [0, 0, 1, 1], [], []>} : vector<1x32xf32>, vector<32x128xf32>, vector<1x128xf32> -> vector<1x128xf32>
    %c0_18 = arith.constant 0 : index
    %c0_19 = arith.constant 0 : index
    %41 = vector.load %arg7[%c0_18, %c0_19] : memref<1x128xf32, #tpu.memory_space<vmem>>, vector<1x128xf32>
    %42 = arith.addf %40, %41 : vector<1x128xf32>
    %cst_20 = arith.constant dense<0xFF800000> : vector<1xf32>
    %43 = vector.multi_reduction <maximumf>, %42, %cst_20 [1] : vector<1x128xf32> to vector<1xf32>
    %44 = vector.shape_cast %43 : vector<1xf32> to vector<1x1xf32>
    %45 = vector.broadcast %44 : vector<1x1xf32> to vector<1x128xf32>
    %46 = arith.subf %42, %45 : vector<1x128xf32>
    %47 = math.exp %46 : vector<1x128xf32>
    %cst_21 = arith.constant dense<0.000000e+00> : vector<1xf32>
    %48 = vector.multi_reduction <add>, %47, %cst_21 [1] : vector<1x128xf32> to vector<1xf32>
    %49 = vector.shape_cast %48 : vector<1xf32> to vector<1x1xf32>
    %50 = math.log %49 : vector<1x1xf32>
    %51 = vector.broadcast %50 : vector<1x1xf32> to vector<1x128xf32>
    %52 = arith.subf %46, %51 : vector<1x128xf32>
    %c0_22 = arith.constant 0 : index
    %c0_23 = arith.constant 0 : index
    %c0_24 = arith.constant 0 : index
    %53 = vector.load %arg8[%c0_22, %c0_23, %c0_24] : memref<1x1x128xf32, #tpu.memory_space<vmem>>, vector<1x1x128xf32>
    %54 = vector.shape_cast %53 : vector<1x1x128xf32> to vector<1x128xf32>
    %55 = vector.shape_cast %52 : vector<1x128xf32> to vector<1x1x128xf32>
    tpu.vector_store %arg8[%c0_22, %c0_23, %c0_24], %55 {strides = array<i32>} : memref<1x1x128xf32, #tpu.memory_space<vmem>>, vector<1x1x128xf32>,
    return
  }
  func.func @transform_0(%arg0: i32, %arg1: memref<1xi32, #tpu.memory_space<smem>>) -> (i32, i32) {
    %c0_i32 = arith.constant 0 : i32
    %c0_i32_0 = arith.constant 0 : i32
    %c0_i32_1 = arith.constant 0 : i32
    return %c0_i32, %c0_i32_0 : i32, i32
  }
  func.func @transform_1(%arg0: i32, %arg1: memref<1xi32, #tpu.memory_space<smem>>) -> (i32, i32) {
    %c0_i32 = arith.constant 0 : i32
    %c0_i32_0 = arith.constant 0 : i32
    %c0_i32_1 = arith.constant 0 : i32
    return %c0_i32, %c0_i32_0 : i32, i32
  }
  func.func @transform_2(%arg0: i32, %arg1: memref<1xi32, #tpu.memory_space<smem>>) -> (i32, i32) {
    %c0_i32 = arith.constant 0 : i32
    %c0_i32_0 = arith.constant 0 : i32
    %c0_i32_1 = arith.constant 0 : i32
    return %c0_i32, %c0_i32_0 : i32, i32
  }
  func.func @transform_3(%arg0: i32, %arg1: memref<1xi32, #tpu.memory_space<smem>>) -> (i32, i32) {
    %c0_i32 = arith.constant 0 : i32
    %c0_i32_0 = arith.constant 0 : i32
    %c0_i32_1 = arith.constant 0 : i32
    return %c0_i32, %c0_i32_0 : i32, i32
  }
  func.func @transform_4(%arg0: i32, %arg1: memref<1xi32, #tpu.memory_space<smem>>) -> (i32, i32) {
    %c0_i32 = arith.constant 0 : i32
    %c0_i32_0 = arith.constant 0 : i32
    %c0_i32_1 = arith.constant 0 : i32
    return %c0_i32, %c0_i32_0 : i32, i32
  }
  func.func @transform_5(%arg0: i32, %arg1: memref<1xi32, #tpu.memory_space<smem>>) -> (i32, i32) {
    %c0_i32 = arith.constant 0 : i32
    %c0_i32_0 = arith.constant 0 : i32
    %c0_i32_1 = arith.constant 0 : i32
    return %c0_i32, %c0_i32_0 : i32, i32
  }
  func.func @transform_6(%arg0: i32, %arg1: memref<1xi32, #tpu.memory_space<smem>>) -> (i32, i32, i32) {
    %c0_i32 = arith.constant 0 : i32
    %c0_i32_0 = arith.constant 0 : i32
    %c0_i32_1 = arith.constant 0 : i32
    return %arg0, %c0_i32, %c0_i32_0 : i32, i32, i32
  }
  func.func @transform_7(%arg0: i32, %arg1: memref<1xi32, #tpu.memory_space<smem>>) -> (i32, i32) {
    %c0_i32 = arith.constant 0 : i32
    %c0_i32_0 = arith.constant 0 : i32
    %c0_i32_1 = arith.constant 0 : i32
    return %c0_i32, %c0_i32_0 : i32, i32
  }
}

</mosaic_0001>

<llo_original>
// kernel: tpu_custom_call.1
$region0: #{tpu_custom_call.1}
  #allocation0 [shape = 'u32[]', space=smem, size = 0x4, offset = 0x4, fixed_abs, tag = 'smem constant byte address 0x4 - core index']
  #allocation1 [shape = 'u32[144,128]{1,0:T(1,128)}', space=vmem, size = 0x12000, scoped, tag = 'internal scratch']
  #allocation2 [shape = 'f32[1,32]{1,0:T(1,128)}', space=vmem, size = 0x200, scoped, tag = 'scratch operand']
  #allocation3 [shape = 's32[1]{0}', space=sflag, size = 0x4, scoped, tag = 'scoped memory for tpu_custom_call.1']
  #allocation4 [shape = 's32[1]{0:T(128)S(6)}', space=smem, size = 0x200, scoped, tag = 'prefetched SMEM operand 0']
  %s0 = inlined_call_operand.<no memory space> [shape: s32[1], index: 0, kind: input, shape index: {}]
  %s1 = inlined_call_operand.vmem [shape: f32[64,32], index: 1, kind: input, shape index: {}]
  %s2 = inlined_call_operand.vmem [shape: f32[1,32], index: 2, kind: input, shape index: {}]
  %s3 = inlined_call_operand.vmem [shape: f32[64,128], index: 3, kind: input, shape index: {}]
  %s4 = inlined_call_operand.vmem [shape: f32[1,128], index: 4, kind: input, shape index: {}]
  %s5 = inlined_call_operand.vmem [shape: f32[32,128], index: 5, kind: input, shape index: {}]
  %s6 = inlined_call_operand.vmem [shape: f32[1,128], index: 6, kind: input, shape index: {}]
  %s7 = inlined_call_operand.hbm [shape: f32[1,1,128], index: 7, kind: output, shape index: {0}]
  %s8 = inlined_call_operand.hbm [shape: f32[1,32], index: 8, kind: output, shape index: {1}]
  %9 = xla_tuple %s7, %s8
  %s10 = sld [smem:[#allocation0]]
  $region46: #{tpu_custom_call.1} parent=0
    _
  %s12 = ssub.s32 1, %s10
  %s13 = scalar_select 0, %s12, %s10
  %14 = sst [smem:[#allocation4]] %s0
  $region1: #{tpu_custom_call.1} parent=0
    #allocation5 [shape = 'u8[512]{0}', space=vmem, size = 0x400, scoped, tag = 'output window, operand 0, single buffered']
    #allocation6 [shape = 's32[1]{0}', space=sflag, size = 0x4, scoped, tag = 'scoped memory for tpu_custom_call.1']
    #allocation7 [shape = 'u8[512]{0}', space=vmem, size = 0x400, scoped, tag = 'output window, operand 1, single buffered']
    #allocation8 [shape = 's32[1]{0}', space=sflag, size = 0x4, scoped, tag = 'scoped memory for tpu_custom_call.1']
    %15 = vsyncpa [#allocation6], 0
    %16 = vsyncpa [#allocation8], 0
    // Predicated region
    $region2: #{tpu_custom_call.1} parent=1 // pred_check
      _
    $region3: #{tpu_custom_call.1} parent=1 // pred_check_branch
      %18 = sbr.rel (0) target = $region5
    $region4: #{tpu_custom_call.1} parent=1 // pred_region
      _
    $region5: #{tpu_custom_call.1} parent=1 // pred_fallthru
      _
    // Predicated region
    $region6: #{tpu_custom_call.1} parent=1 // pred_check
      _
    $region7: #{tpu_custom_call.1} parent=1 // pred_check_branch
      %20 = sbr.rel (0) target = $region9
    $region8: #{tpu_custom_call.1} parent=1 // pred_region
      _
    $region9: #{tpu_custom_call.1} parent=1 // pred_fallthru
      _
    // Predicated region
    $region10: #{tpu_custom_call.1} parent=1 // pred_check
      _
    $region11: #{tpu_custom_call.1} parent=1 // pred_check_branch
      %22 = sbr.rel (0) target = $region13
    $region12: #{tpu_custom_call.1} parent=1 // pred_region
      _
    $region13: #{tpu_custom_call.1} parent=1 // pred_fallthru
      _
    // Predicated region
    $region14: #{tpu_custom_call.1} parent=1 // pred_check
      _
    $region15: #{tpu_custom_call.1} parent=1 // pred_check_branch
      %24 = sbr.rel (0) target = $region17
    $region16: #{tpu_custom_call.1} parent=1 // pred_region
      _
    $region17: #{tpu_custom_call.1} parent=1 // pred_fallthru
      _
    // Predicated region
    $region18: #{tpu_custom_call.1} parent=1 // pred_check
      _
    $region19: #{tpu_custom_call.1} parent=1 // pred_check_branch
      %26 = sbr.rel (0) target = $region21
    $region20: #{tpu_custom_call.1} parent=1 // pred_region
      _
    $region21: #{tpu_custom_call.1} parent=1 // pred_fallthru
      _
    // Predicated region
    $region22: #{tpu_custom_call.1} parent=1 // pred_check
      _
    $region23: #{tpu_custom_call.1} parent=1 // pred_check_branch
      %28 = sbr.rel (0) target = $region25
    $region24: #{tpu_custom_call.1} parent=1 // pred_region
      _
    $region25: #{tpu_custom_call.1} parent=1 // pred_fallthru
      _
    %p29 = scmp.eq.s32.totalorder 0, 0
    // Predicated region
    $region26: #{tpu_custom_call.1} parent=1 // pred_check
      %p30 = pneg %p29
    $region27: #{tpu_custom_call.1} parent=1 // pred_check_branch
      %32 = sbr.rel (%p30) target = $region29
    $region28: #{tpu_custom_call.1} parent=1 // pred_region
      %v33 = vld [vmem:[%s2] sm:$0x1]
      %vm34 = vcmask 253952
      %35 = vst.msk [vmem:[#allocation2] sm:$0x1] %vm34, %v33
    $region29: #{tpu_custom_call.1} parent=1 // pred_fallthru
      _
    %s36 = sld [smem:[#allocation4]]
    %s37 = scalar_lea.vmem %s1, %s36
    %v38 = vld [vmem:[%s37] sm:$0x1]
    %v39 = vmax.f32 %v38, 0.0
    %v40 = vld [vmem:[#allocation2] sm:$0x1]
    %v42 = vlaneseq
    %v43 = vshrl.u32 %v42, 7
    %v44 = vsub.s32 0, %v43
    %v45 = vrot.slane %v40, %v44
    %46 = vrot.lane.b32.xlu0 %v45, 32
    %v47 = vpop.permute.xlu0 %46
    %vm49 = vcmask 261120
    %v50 = vsel %vm49, %v39, %v47
    %v51 = vld [vmem:[%s3] sm:$0xff]
    %v52 = vld [vmem:[%s3 + $0x8] sm:$0xff]
    %v53 = vld [vmem:[%s3 + $0x10] sm:$0xff]
    %v54 = vld [vmem:[%s3 + $0x18] sm:$0xff]
    %v55 = vld [vmem:[%s3 + $0x20] sm:$0xff]
    %v56 = vld [vmem:[%s3 + $0x28] sm:$0xff]
    %v57 = vld [vmem:[%s3 + $0x30] sm:$0xff]
    %v58 = vld [vmem:[%s3 + $0x38] sm:$0xff]
    %v59 = vld [vmem:[%s4] sm:$0x1]
    %vm60 = vcmask 523264
    %v62 = vsel %vm60, %v50, 0
    %64 = vmatprep.subr.mxu0 0.0
    %65 = vmatpush1.msra.mxu0 0.0
    %66 = vmatprep.subr.mxu0 0.0
    %67 = vmatpush1.msra.mxu0 0.0
    %68 = vmatprep.subr.mxu0 0.0
    %69 = vmatpush1.msra.mxu0 0.0
    %70 = vmatprep.subr.mxu0 0.0
    %71 = vmatpush1.msra.mxu0 0.0
    %72 = vmatprep.subr.mxu0 0.0
    %73 = vmatpush1.msra.mxu0 0.0
    %74 = vmatprep.subr.mxu0 0.0
    %75 = vmatpush1.msra.mxu0 0.0
    %76 = vmatprep.subr.mxu0 0.0
    %77 = vmatpush1.msra.mxu0 0.0
    %78 = vmatprep.subr.mxu0 0.0
    %79 = vmatpush1.msra.mxu0 0.0
    %80 = vmatprep.subr.mxu0 0.0
    %81 = vmatpush1.msra.mxu0 %v58
    %82 = vmatprep.subr.mxu0 0.0
    %83 = vmatpush1.msra.mxu0 %v57
    %84 = vmatprep.subr.mxu0 0.0
    %85 = vmatpush1.msra.mxu0 %v56
    %86 = vmatprep.subr.mxu0 0.0
    %87 = vmatpush1.msra.mxu0 %v55
    %88 = vmatprep.subr.mxu0 0.0
    %89 = vmatpush1.msra.mxu0 %v54
    %90 = vmatprep.subr.mxu0 0.0
    %91 = vmatpush1.msra.mxu0 %v53
    %92 = vmatprep.subr.mxu0 0.0
    %93 = vmatpush1.msra.mxu0 %v52
    %94 = vmatprep.subr.mxu0 0.0
    %95 = vmatpush1.msra.mxu0 %v51
    %96 = vmatprep.subr.mxu0 0.0
    %97 = vmatpush2.msra.mxu0 0.0
    %98 = vmatprep.subr.mxu0 0.0
    %99 = vmatpush2.msra.mxu0 0.0
    %100 = vmatprep.subr.mxu0 0.0
    %101 = vmatpush2.msra.mxu0 0.0
    %102 = vmatprep.subr.mxu0 0.0
    %103 = vmatpush2.msra.mxu0 0.0
    %104 = vmatprep.subr.mxu0 0.0
    %105 = vmatpush2.msra.mxu0 0.0
    %106 = vmatprep.subr.mxu0 0.0
    %107 = vmatpush2.msra.mxu0 0.0
    %108 = vmatprep.subr.mxu0 0.0
    %109 = vmatpush2.msra.mxu0 0.0
    %110 = vmatprep.subr.mxu0 0.0
    %111 = vmatpush2.msra.mxu0 0.0
    %112 = vmatprep.subr.mxu0 0.0
    %113 = vmatpush2.msra.mxu0 0.0
    %114 = vmatprep.subr.mxu0 0.0
    %115 = vmatpush2.msra.mxu0 0.0
    %116 = vmatprep.subr.mxu0 0.0
    %117 = vmatpush2.msra.mxu0 0.0
    %118 = vmatprep.subr.mxu0 0.0
    %119 = vmatpush2.msra.mxu0 0.0
    %120 = vmatprep.subr.mxu0 0.0
    %121 = vmatpush2.msra.mxu0 0.0
    %122 = vmatprep.subr.mxu0 0.0
    %123 = vmatpush2.msra.mxu0 0.0
    %124 = vmatprep.subr.mxu0 0.0
    %125 = vmatpush2.msra.mxu0 0.0
    %126 = vmatprep.subr.mxu0 0.0
    %127 = vmatpush2.msra.mxu0 0.0
    %128 = vmatprep.mubr.f32.mxu0 0.0
    %129 = vmatmul.mubr.f32.gmra.mxu0 %v62
    %v130 = vpop.f32.mrf.mxu0
    %v131 = vadd.f32 %v59, %v130
    %v132 = vpop.f32.mrf.mxu0
    %133 = vdwg.mxu0
    %v134 = vxor.u32 %v131, 2147483648
    %v135 = vmul.f32 %v134, 1.442695
    %v136 = vpow.pop %v135
    %v137 = vadd.f32 %v136, 1.0
    %v138 = vrcp.pop %v137
    %v139 = vmul.f32 1.0, %v138
    %141 = vrot.lane.b32.xlu0 %v131, 32
    %v142 = vpop.permute.xlu0 %141
    %v144 = vmul.f32 %v139, %v142
    %146 = vrot.lane.b32.xlu0 %v144, 64
    %v147 = vpop.permute.xlu0 %146
    %v149 = vadd.f32 %v131, %v147
    %v150 = vtanh.pop %v149
    %v151 = vsub.f32 1.0, %v139
    %153 = vrot.lane.b32.xlu0 %v150, 96
    %v154 = vpop.permute.xlu0 %153
    %v156 = vmul.f32 %v151, %v154
    %v157 = vmul.f32 %v139, %v47
    %v158 = vadd.f32 %v156, %v157
    %160 = vrot.lane.b32.xlu0 %v158, 96
    %v161 = vpop.permute.xlu0 %160
    %vm163 = vcmask 253952
    %164 = vst.msk [vmem:[#allocation2] sm:$0x1] %vm163, %v161
    %165 = vst.msk [vmem:[#allocation7] sm:$0x1] %vm163, %v161
    %v166 = vld [vmem:[%s5] sm:$0xff]
    %v167 = vld [vmem:[%s5 + $0x8] sm:$0xff]
    %v168 = vld [vmem:[%s5 + $0x10] sm:$0xff]
    %v169 = vld [vmem:[%s5 + $0x18] sm:$0xff]
    %v170 = vld [vmem:[%s6] sm:$0x1]
    %v171 = vsel %vm49, %v161, 0
    %173 = vmatprep.subr.mxu0 0.0
    %174 = vmatpush1.msra.mxu0 0.0
    %175 = vmatprep.subr.mxu0 0.0
    %176 = vmatpush1.msra.mxu0 0.0
    %177 = vmatprep.subr.mxu0 0.0
    %178 = vmatpush1.msra.mxu0 0.0
    %179 = vmatprep.subr.mxu0 0.0
    %180 = vmatpush1.msra.mxu0 0.0
    %181 = vmatprep.subr.mxu0 0.0
    %182 = vmatpush1.msra.mxu0 0.0
    %183 = vmatprep.subr.mxu0 0.0
    %184 = vmatpush1.msra.mxu0 0.0
    %185 = vmatprep.subr.mxu0 0.0
    %186 = vmatpush1.msra.mxu0 0.0
    %187 = vmatprep.subr.mxu0 0.0
    %188 = vmatpush1.msra.mxu0 0.0
    %189 = vmatprep.subr.mxu0 0.0
    %190 = vmatpush1.msra.mxu0 0.0
    %191 = vmatprep.subr.mxu0 0.0
    %192 = vmatpush1.msra.mxu0 0.0
    %193 = vmatprep.subr.mxu0 0.0
    %194 = vmatpush1.msra.mxu0 0.0
    %195 = vmatprep.subr.mxu0 0.0
    %196 = vmatpush1.msra.mxu0 0.0
    %197 = vmatprep.subr.mxu0 0.0
    %198 = vmatpush1.msra.mxu0 %v169
    %199 = vmatprep.subr.mxu0 0.0
    %200 = vmatpush1.msra.mxu0 %v168
    %201 = vmatprep.subr.mxu0 0.0
    %202 = vmatpush1.msra.mxu0 %v167
    %203 = vmatprep.subr.mxu0 0.0
    %204 = vmatpush1.msra.mxu0 %v166
    %205 = vmatprep.subr.mxu0 0.0
    %206 = vmatpush2.msra.mxu0 0.0
    %207 = vmatprep.subr.mxu0 0.0
    %208 = vmatpush2.msra.mxu0 0.0
    %209 = vmatprep.subr.mxu0 0.0
    %210 = vmatpush2.msra.mxu0 0.0
    %211 = vmatprep.subr.mxu0 0.0
    %212 = vmatpush2.msra.mxu0 0.0
    %213 = vmatprep.subr.mxu0 0.0
    %214 = vmatpush2.msra.mxu0 0.0
    %215 = vmatprep.subr.mxu0 0.0
    %216 = vmatpush2.msra.mxu0 0.0
    %217 = vmatprep.subr.mxu0 0.0
    %218 = vmatpush2.msra.mxu0 0.0
    %219 = vmatprep.subr.mxu0 0.0
    %220 = vmatpush2.msra.mxu0 0.0
    %221 = vmatprep.subr.mxu0 0.0
    %222 = vmatpush2.msra.mxu0 0.0
    %223 = vmatprep.subr.mxu0 0.0
    %224 = vmatpush2.msra.mxu0 0.0
    %225 = vmatprep.subr.mxu0 0.0
    %226 = vmatpush2.msra.mxu0 0.0
    %227 = vmatprep.subr.mxu0 0.0
    %228 = vmatpush2.msra.mxu0 0.0
    %229 = vmatprep.subr.mxu0 0.0
    %230 = vmatpush2.msra.mxu0 0.0
    %231 = vmatprep.subr.mxu0 0.0
    %232 = vmatpush2.msra.mxu0 0.0
    %233 = vmatprep.subr.mxu0 0.0
    %234 = vmatpush2.msra.mxu0 0.0
    %235 = vmatprep.subr.mxu0 0.0
    %236 = vmatpush2.msra.mxu0 0.0
    %237 = vmatprep.mubr.f32.mxu0 0.0
    %238 = vmatmul.mubr.f32.gmra.mxu0 %v171
    %v239 = vpop.f32.mrf.mxu0
    %v240 = vadd.f32 %v170, %v239
    %v241 = vpop.f32.mrf.mxu0
    %242 = vdwg.mxu0
    %vm243 = vcmask 1040384
    %v244 = vsel %vm243, %v240, -inf
    %245 = vmax.xlane.f32.xlu0 %v244
    %v246 = vpop.xlane.xlu0 %245
    %v247 = vsub.f32 %v240, %v246
    %v248 = vmul.f32 %v247, 1.442695
    %v249 = vpow.pop %v248
    %v250 = vsel %vm243, %v249, 0.0
    %251 = vadd.xlane.f32.xlu0 %v250
    %v252 = vpop.xlane.xlu0 %251
    %v253 = vlog2.pop %v252
    %v254 = vmul.f32 %v253, 0.6931472
    %v255 = vsub.f32 %v247, %v254
    %256 = vst [vmem:[#allocation5] sm:$0x1] %v255
    // Predicated region
    $region30: #{tpu_custom_call.1} parent=1 // pred_check
      _
    $region31: #{tpu_custom_call.1} parent=1 // pred_check_branch
      %258 = sbr.rel (0) target = $region33
    $region32: #{tpu_custom_call.1} parent=1 // pred_region
      %s260 = ssub.s32 16, 16
      %261 = vsyncadd [#allocation6], %s260
      %s263 = sshll.u32 [#allocation5], 4
      %s264 = int_to_ptr.vmem [resolvable:$true] %s263
      %266 = dma.vmem_to_hbm [thread:$0]  %s264, 16, %s7, [#allocation6]
    $region33: #{tpu_custom_call.1} parent=1 // pred_fallthru
      _
    // Predicated region
    $region34: #{tpu_custom_call.1} parent=1 // pred_check
      _
    $region35: #{tpu_custom_call.1} parent=1 // pred_check_branch
      %268 = sbr.rel (0) target = $region37
    $region36: #{tpu_custom_call.1} parent=1 // pred_region
      %s270 = ssub.s32 16, 16
      %271 = vsyncadd [#allocation8], %s270
      %s273 = sshll.u32 [#allocation7], 4
      %s274 = int_to_ptr.vmem [resolvable:$true] %s273
      %276 = dma.vmem_to_hbm [thread:$0]  %s274, 16, %s8, [#allocation8]
    $region37: #{tpu_custom_call.1} parent=1 // pred_fallthru
      _
    // Predicated region
    $region38: #{tpu_custom_call.1} parent=1 // pred_check
      _
    $region39: #{tpu_custom_call.1} parent=1 // pred_check_branch
      %278 = sbr.rel (0) target = $region41
    $region40: #{tpu_custom_call.1} parent=1 // pred_region
      %279 = dma.done [#allocation6], 16
    $region41: #{tpu_custom_call.1} parent=1 // pred_fallthru
      _
    // Predicated region
    $region42: #{tpu_custom_call.1} parent=1 // pred_check
      _
    $region43: #{tpu_custom_call.1} parent=1 // pred_check_branch
      %281 = sbr.rel (0) target = $region45
    $region44: #{tpu_custom_call.1} parent=1 // pred_region
      %282 = dma.done [#allocation8], 16
    $region45: #{tpu_custom_call.1} parent=1 // pred_fallthru
      _
    %283 = vsyncpa [#allocation6], 1
    %284 = vsyncpa [#allocation8], 1

</llo_original>
